<compile_context>
chip_gen: v5e
topology: v5e:2x2
jax: 0.10.0
libtpu: 0.0.40
codegen_flags: <defaults>
</compile_context>

<pallas_src>
import functools

import jax
import jax.numpy as jnp
from jax.experimental import pallas as pl
from jax.experimental.pallas import tpu as pltpu

EPS = 1e-8
SMOOTH = 0.01

_VMEM_LIMIT_BYTES = 32 * 1024 * 1024  # explicit, with headroom on every generation


def _spatial_tiling(S, C, itemsize, max_tile=16384, logit_budget_bytes=8 * 1024 * 1024):
    """Pick (S_pad, S_TILE): lane-dense tile that keeps 2x double-buffered logit
    blocks well under the scoped-VMEM default on v5e/v6e/v7x."""
    cap = logit_budget_bytes // (2 * max(C, 1) * itemsize)
    cap = max(512, (cap // 512) * 512)
    max_tile = min(max_tile, cap)
    lane_pad = ((S + 511) // 512) * 512
    if lane_pad <= max_tile:
        return lane_pad, lane_pad            # single spatial tile
    s_tile = max_tile
    s_pad = ((S + s_tile - 1) // s_tile) * s_tile
    return s_pad, s_tile


def _gdice_plain_kernel(logit_ref, gt_ref, out_ref, *, denom_total: float):
    # logit_ref: (1, C, T) native dtype ; gt_ref: (1, 1, T) i32 ; out_ref: (1, 8, 128) f32
    s = pl.program_id(1)

    @pl.when(s == 0)
    def _():
        out_ref[...] = jnp.zeros_like(out_ref)

    logit = logit_ref[0].astype(jnp.float32)          # (C, T)
    C = logit.shape[0]

    # numerically-stable channel softmax, normalization deferred to the selected row
    m = jnp.max(logit, axis=0, keepdims=True)         # (1, T)
    e = jnp.exp(logit - m)                            # (C, T)
    rz = pl.reciprocal(jnp.sum(e, axis=0, keepdims=True), approx=True)  # (1, T), EUP

    gt = gt_ref[0]                                    # (1, T) int32 (pad = -1 -> no match)
    cls = jax.lax.broadcasted_iota(jnp.int32, (C, 1), 0)  # tiny per-tile iota
    # selected-channel exp (one-hot never materialized); padded lanes contribute 0
    sel = jnp.sum(jnp.where(gt == cls, e, 0.0), axis=0, keepdims=True)  # (1, T)

    out_ref[...] += jnp.sum(sel * rz)                 # per-batch intersect accumulator

    @pl.when(s == pl.num_programs(1) - 1)
    def _():
        # denom = 2*S exactly (sum_c softmax = 1, sum_c onehot = 1)
        out_ref[...] = 1.0 - (out_ref[...] + SMOOTH) / denom_total


def _gdice_weighted_kernel(logit_ref, gt_ref, inter_ref, cnt_ref):
    # Per-(batch, class) partial sums; cross-batch class weighting done in the wrapper.
    s = pl.program_id(1)

    @pl.when(s == 0)
    def _():
        inter_ref[...] = jnp.zeros_like(inter_ref)
        cnt_ref[...] = jnp.zeros_like(cnt_ref)

    logit = logit_ref[0].astype(jnp.float32)          # (C, T)
    C = logit.shape[0]
    m = jnp.max(logit, axis=0, keepdims=True)
    e = jnp.exp(logit - m)
    rz = pl.reciprocal(jnp.sum(e, axis=0, keepdims=True), approx=True)  # (1, T)

    gt = gt_ref[0]                                    # (1, T)
    cls = jax.lax.broadcasted_iota(jnp.int32, (C, 1), 0)
    hit = gt == cls                                   # (C, T) bool

    inter_c = jnp.sum(jnp.where(hit, e * rz, 0.0), axis=1, keepdims=True)  # (C, 1)
    cnt_c = jnp.sum(jnp.where(hit, 1.0, 0.0), axis=1, keepdims=True)       # (C, 1)

    inter_ref[...] += inter_c[None]                   # broadcast over 128 lanes
    cnt_ref[...] += cnt_c[None]


def gdice_loss(logit, gt, *, with_weight: bool = False, ignore_label=None,
               reduction: str = "mean"):
    """logit: (B, C, H, W) float (any float dtype), gt: (B, H, W) integer labels."""
    if ignore_label is not None:
        # TODO(synk): ignore_label channel-drop path not implemented (module default is None).
        raise NotImplementedError("ignore_label is not supported by the Pallas kernel.")

    B, C, H, W = logit.shape
    S = H * W
    S_pad, S_TILE = _spatial_tiling(S, C, jnp.dtype(logit.dtype).itemsize)

    # Keep logits in native dtype (no wrapper upcast); cast to f32 inside the kernel.
    logit_f = logit.reshape(B, C, S)
    gt_f = gt.reshape(B, 1, S).astype(jnp.int32)
    if S_pad != S:
        logit_f = jnp.pad(logit_f, ((0, 0), (0, 0), (0, S_pad - S)))
        gt_f = jnp.pad(gt_f, ((0, 0), (0, 0), (0, S_pad - S)), constant_values=-1)

    grid = (B, S_pad // S_TILE)
    in_specs = [
        pl.BlockSpec((1, C, S_TILE), lambda b, s: (b, 0, s)),
        pl.BlockSpec((1, 1, S_TILE), lambda b, s: (b, 0, s)),
    ]
    compiler_params = pltpu.CompilerParams(
        dimension_semantics=("parallel", "arbitrary"),
        vmem_limit_bytes=_VMEM_LIMIT_BYTES,
    )
    denom_total = 2.0 * S + EPS + SMOOTH

    if not with_weight:
        out = pl.pallas_call(
            functools.partial(_gdice_plain_kernel, denom_total=denom_total),
            grid=grid,
            in_specs=in_specs,
            out_specs=pl.BlockSpec((1, 8, 128), lambda b, s: (b, 0, 0)),
            out_shape=jax.ShapeDtypeStruct((B, 8, 128), jnp.float32),
            compiler_params=compiler_params,
        )(logit_f, gt_f)
        loss_per_batch = out[:, 0, 0]                              # (B,)
    else:
        inter_out, cnt_out = pl.pallas_call(
            _gdice_weighted_kernel,
            grid=grid,
            in_specs=in_specs,
            out_specs=(
                pl.BlockSpec((1, C, 128), lambda b, s: (b, 0, 0)),
                pl.BlockSpec((1, C, 128), lambda b, s: (b, 0, 0)),
            ),
            out_shape=(
                jax.ShapeDtypeStruct((B, C, 128), jnp.float32),
                jax.ShapeDtypeStruct((B, C, 128), jnp.float32),
            ),
            compiler_params=compiler_params,
        )(logit_f, gt_f)
        inter_bc = inter_out[:, :, 0]                              # (B, C)
        cnt_bc = cnt_out[:, :, 0]                                  # (B, C)
        cls_tot = jnp.sum(cnt_bc, axis=0)                          # (C,) cross-batch
        w = 1.0 / (cls_tot * cls_tot + EPS)
        intersect = jnp.sum(inter_bc * w[None, :], axis=1)         # (B,)
        loss_per_batch = 1.0 - (intersect + SMOOTH) / denom_total

    if reduction == "mean":
        return jnp.mean(loss_per_batch)
    elif reduction == "none":
        return loss_per_batch
    else:
        raise ValueError(f"Unrecognized reduction method ({reduction}).")


def _gdice_ref(logit, gt, *, with_weight: bool = False):
    """Pure-JAX reference mirroring the PyTorch code."""
    B, C, H, W = logit.shape
    pred = jax.nn.softmax(logit.astype(jnp.float32), axis=1).reshape(B, C, -1)
    gt1h = jax.nn.one_hot(gt.astype(jnp.int32), C, axis=1, dtype=jnp.float32).reshape(B, C, -1)
    if with_weight:
        cls_tot = jnp.sum(jnp.transpose(gt1h, (1, 0, 2)).reshape(C, -1), axis=-1)
        w = 1.0 / (cls_tot * cls_tot + EPS)
        intersect = jnp.sum(jnp.sum(pred * gt1h, axis=-1) * w[None, :], axis=-1)
    else:
        intersect = jnp.sum(pred * gt1h, axis=(-2, -1))
    denom = jnp.sum(pred, axis=(-2, -1)) + jnp.sum(gt1h, axis=(-2, -1))
    per_batch = 1.0 - (intersect + SMOOTH) / (denom + EPS + SMOOTH)
    return jnp.mean(per_batch)


if __name__ == "__main__":
    key = jax.random.PRNGKey(0)
    k1, k2, k3, k4 = jax.random.split(key, 4)

    # Tolerance note: kernel uses pl.reciprocal(approx=True) for the softmax
    # denominator and the exact denom = 2*S identity; both shifts are <<1e-3.
    TOL = 1e-3

    # Case 1: default path (with_weight=False), f32 logits.
    B, C, H, W = 2, 4, 16, 16
    logit = jax.random.normal(k1, (B, C, H, W), dtype=jnp.float32)
    gt = jax.random.randint(k2, (B, H, W), 0, C, dtype=jnp.int32)
    loss = jax.block_until_ready(gdice_loss(logit, gt, with_weight=False))
    ref = _gdice_ref(logit, gt, with_weight=False)
    assert jnp.allclose(loss, ref, atol=TOL, rtol=TOL), (loss, ref)

    # Case 2: class-weighted path.
    loss_w = jax.block_until_ready(gdice_loss(logit, gt, with_weight=True))
    ref_w = _gdice_ref(logit, gt, with_weight=True)
    assert jnp.allclose(loss_w, ref_w, atol=TOL, rtol=TOL), (loss_w, ref_w)

    # Case 3: bf16 logits + non-128-multiple spatial size (exercises padding).
    B2, C2, H2, W2 = 2, 3, 20, 20
    logit2 = jax.random.normal(k3, (B2, C2, H2, W2), dtype=jnp.float32).astype(jnp.bfloat16)
    gt2 = jax.random.randint(k4, (B2, H2, W2), 0, C2, dtype=jnp.int32)
    loss2 = jax.block_until_ready(gdice_loss(logit2, gt2, with_weight=False))
    ref2 = _gdice_ref(logit2, gt2, with_weight=False)
    assert jnp.allclose(loss2, ref2, atol=TOL, rtol=TOL), (loss2, ref2)

    print("KERNEL_OK")
</pallas_src>

<mosaic_0001>
module attributes {stable_mosaic.version = 11 : i64} {
  func.func @_gdice_plain_kernel(%arg0: i32, %arg1: i32, %arg2: memref<1x4x512xf32, #tpu.memory_space<vmem>>, %arg3: memref<1x1x512xi32, #tpu.memory_space<vmem>>, %arg4: memref<1x8x128xf32, #tpu.memory_space<vmem>>) attributes {dimension_semantics = [#tpu.dimension_semantics<parallel>, #tpu.dimension_semantics<arbitrary>], iteration_bounds = array<i64: 2, 1>, scalar_prefetch = 0 : i64, scratch_operands = 0 : i64, tpu.core_type = #tpu.core_type<tc>, window_params = [{transform_indices = @transform_0, window_bounds = array<i64: 1, 4, 512>}, {transform_indices = @transform_1, window_bounds = array<i64: 1, 1, 512>}, {transform_indices = @transform_2, window_bounds = array<i64: 1, 8, 128>}]} {
    %c0_i32 = arith.constant 0 : i32
    %0 = arith.cmpi eq, %arg1, %c0_i32 : i32
    %1 = arith.extui %0 : i1 to i32
    %c0_i32_0 = arith.constant 0 : i32
    %2 = arith.cmpi ne, %1, %c0_i32_0 : i32
    scf.if %2 {
      %cst_18 = arith.constant 0.000000e+00 : f32
      %35 = vector.broadcast %cst_18 : f32 to vector<1x8x128xf32>
      %c0_19 = arith.constant 0 : index
      %c0_20 = arith.constant 0 : index
      %c0_21 = arith.constant 0 : index
      %36 = vector.load %arg4[%c0_19, %c0_20, %c0_21] : memref<1x8x128xf32, #tpu.memory_space<vmem>>, vector<1x8x128xf32>
      tpu.vector_store %arg4[%c0_19, %c0_20, %c0_21], %35 {strides = array<i32>} : memref<1x8x128xf32, #tpu.memory_space<vmem>>, vector<1x8x128xf32>,
    } else {
    }
    %c0 = arith.constant 0 : index
    %c0_1 = arith.constant 0 : index
    %c0_2 = arith.constant 0 : index
    %3 = vector.load %arg2[%c0, %c0_1, %c0_2] : memref<1x4x512xf32, #tpu.memory_space<vmem>>, vector<1x4x512xf32>
    %4 = vector.shape_cast %3 : vector<1x4x512xf32> to vector<4x512xf32>
    %cst = arith.constant dense<0xFF800000> : vector<512xf32>
    %5 = vector.multi_reduction <maximumf>, %4, %cst [0] : vector<4x512xf32> to vector<512xf32>
    %6 = vector.shape_cast %5 : vector<512xf32> to vector<1x512xf32>
    %7 = vector.broadcast %6 : vector<1x512xf32> to vector<4x512xf32>
    %8 = arith.subf %4, %7 : vector<4x512xf32>
    %9 = math.exp %8 : vector<4x512xf32>
    %cst_3 = arith.constant dense<0.000000e+00> : vector<512xf32>
    %10 = vector.multi_reduction <add>, %9, %cst_3 [0] : vector<4x512xf32> to vector<512xf32>
    %11 = vector.shape_cast %10 : vector<512xf32> to vector<1x512xf32>
    %12 = tpu.reciprocal %11 {approx = true} : vector<1x512xf32> -> vector<1x512xf32>
    %c0_4 = arith.constant 0 : index
    %c0_5 = arith.constant 0 : index
    %c0_6 = arith.constant 0 : index
    %13 = vector.load %arg3[%c0_4, %c0_5, %c0_6] : memref<1x1x512xi32, #tpu.memory_space<vmem>>, vector<1x1x512xi32>
    %14 = vector.shape_cast %13 : vector<1x1x512xi32> to vector<1x512xi32>
    %15 = tpu.iota {dimensions = array<i32: 0>} : vector<4x1xi32>
    %16 = vector.broadcast %14 : vector<1x512xi32> to vector<4x512xi32>
    %17 = vector.broadcast %15 : vector<4x1xi32> to vector<4x512xi32>
    %18 = arith.cmpi eq, %16, %17 : vector<4x512xi32>
    %cst_7 = arith.constant 0.000000e+00 : f32
    %19 = vector.broadcast %cst_7 : f32 to vector<4x512xf32>
    %20 = arith.select %18, %9, %19 : vector<4x512xi1>, vector<4x512xf32>
    %cst_8 = arith.constant dense<0.000000e+00> : vector<512xf32>
    %21 = vector.multi_reduction <add>, %20, %cst_8 [0] : vector<4x512xf32> to vector<512xf32>
    %22 = vector.shape_cast %21 : vector<512xf32> to vector<1x512xf32>
    %c0_9 = arith.constant 0 : index
    %c0_10 = arith.constant 0 : index
    %c0_11 = arith.constant 0 : index
    %23 = vector.load %arg4[%c0_9, %c0_10, %c0_11] : memref<1x8x128xf32, #tpu.memory_space<vmem>>, vector<1x8x128xf32>
    %24 = arith.mulf %22, %12 : vector<1x512xf32>
    %25 = vector.shape_cast %24 : vector<1x512xf32> to vector<1x1x512xf32>
    %cst_12 = arith.constant dense<0.000000e+00> : vector<1xf32>
    %26 = vector.multi_reduction <add>, %25, %cst_12 [1, 2] : vector<1x1x512xf32> to vector<1xf32>
    %27 = vector.shape_cast %26 : vector<1xf32> to vector<1x1x1xf32>
    %28 = vector.extract %27[0, 0, 0] : f32 from vector<1x1x1xf32>
    %29 = vector.broadcast %28 : f32 to vector<1x8x128xf32>
    %30 = arith.addf %23, %29 : vector<1x8x128xf32>
    %c0_13 = arith.constant 0 : index
    %c0_14 = arith.constant 0 : index
    %c0_15 = arith.constant 0 : index
    %31 = vector.load %arg4[%c0_13, %c0_14, %c0_15] : memref<1x8x128xf32, #tpu.memory_space<vmem>>, vector<1x8x128xf32>
    tpu.vector_store %arg4[%c0_13, %c0_14, %c0_15], %30 {strides = array<i32>} : memref<1x8x128xf32, #tpu.memory_space<vmem>>, vector<1x8x128xf32>,
    %c0_i32_16 = arith.constant 0 : i32
    %32 = arith.cmpi eq, %arg1, %c0_i32_16 : i32
    %33 = arith.extui %32 : i1 to i32
    %c0_i32_17 = arith.constant 0 : i32
    %34 = arith.cmpi ne, %33, %c0_i32_17 : i32
    scf.if %34 {
      %c0_18 = arith.constant 0 : index
      %c0_19 = arith.constant 0 : index
      %c0_20 = arith.constant 0 : index
      %35 = vector.load %arg4[%c0_18, %c0_19, %c0_20] : memref<1x8x128xf32, #tpu.memory_space<vmem>>, vector<1x8x128xf32>
      %cst_21 = arith.constant 0.00999999977 : f32
      %36 = vector.broadcast %cst_21 : f32 to vector<1x8x128xf32>
      %37 = arith.addf %35, %36 : vector<1x8x128xf32>
      %cst_22 = arith.constant 5.120100e+02 : f32
      %38 = vector.broadcast %cst_22 : f32 to vector<1x8x128xf32>
      %39 = arith.divf %37, %38 : vector<1x8x128xf32>
      %cst_23 = arith.constant 1.000000e+00 : f32
      %40 = vector.broadcast %cst_23 : f32 to vector<1x8x128xf32>
      %41 = arith.subf %40, %39 : vector<1x8x128xf32>
      %c0_24 = arith.constant 0 : index
      %c0_25 = arith.constant 0 : index
      %c0_26 = arith.constant 0 : index
      %42 = vector.load %arg4[%c0_24, %c0_25, %c0_26] : memref<1x8x128xf32, #tpu.memory_space<vmem>>, vector<1x8x128xf32>
      tpu.vector_store %arg4[%c0_24, %c0_25, %c0_26], %41 {strides = array<i32>} : memref<1x8x128xf32, #tpu.memory_space<vmem>>, vector<1x8x128xf32>,
    } else {
    }
    return
  }
  func.func @transform_0(%arg0: i32, %arg1: i32) -> (i32, i32, i32) {
    %c0_i32 = arith.constant 0 : i32
    %c0_i32_0 = arith.constant 0 : i32
    return %arg0, %c0_i32, %arg1 : i32, i32, i32
  }
  func.func @transform_1(%arg0: i32, %arg1: i32) -> (i32, i32, i32) {
    %c0_i32 = arith.constant 0 : i32
    %c0_i32_0 = arith.constant 0 : i32
    return %arg0, %c0_i32, %arg1 : i32, i32, i32
  }
  func.func @transform_2(%arg0: i32, %arg1: i32) -> (i32, i32, i32) {
    %c0_i32 = arith.constant 0 : i32
    %c0_i32_0 = arith.constant 0 : i32
    %c0_i32_1 = arith.constant 0 : i32
    return %arg0, %c0_i32, %c0_i32_0 : i32, i32, i32
  }
}

</mosaic_0001>

<llo_original>
// kernel: tpu_custom_call.1
$region0: #{tpu_custom_call.1}
  #allocation0 [shape = 'u32[]', space=smem, size = 0x4, offset = 0x4, fixed_abs, tag = 'smem constant byte address 0x4 - core index']
  #allocation1 [shape = 'u32[72,128]{1,0:T(1,128)}', space=vmem, size = 0x9000, scoped, tag = 'internal scratch']
  %s0 = inlined_call_operand.hbm [shape: f32[2,4,512], index: 0, kind: input, shape index: {}]
  %s1 = inlined_call_operand.hbm [shape: s32[2,1,512], index: 1, kind: input, shape index: {}]
  %s2 = inlined_call_operand.hbm [shape: f32[2,8,128], index: 2, kind: output, shape index: {}]
  %s3 = sld [smem:[#allocation0]]
  $region57: #{tpu_custom_call.1} parent=0
    _
  %s5 = ssub.s32 1, %s3
  %s6 = scalar_select 0, %s5, %s3
  $region1: #{tpu_custom_call.1} parent=0
    #allocation2 [shape = 'u8[16384]{0}', space=vmem, size = 0x4000, scoped, tag = 'input window, operand 0']
    #allocation3 [shape = 's32[2]{0}', space=sflag, size = 0x8, scoped, tag = 'scoped memory for tpu_custom_call.1']
    #allocation4 [shape = 's32[2]{0}', space=sflag, size = 0x8, scoped, tag = 'scoped memory for tpu_custom_call.1']
    #allocation5 [shape = 'u8[4096]{0}', space=vmem, size = 0x1000, scoped, tag = 'input window, operand 1']
    #allocation6 [shape = 's32[2]{0}', space=sflag, size = 0x8, scoped, tag = 'scoped memory for tpu_custom_call.1']
    #allocation7 [shape = 'u8[8192]{0}', space=vmem, size = 0x2000, scoped, tag = 'output window, operand 0']
    %7 = vsyncpa [#allocation3], 0
    %s8 = scalar_lea.sflag [#allocation3], 1
    %9 = vsyncpa %s8, 0
    %10 = vsyncpa [#allocation6], 0
    %s11 = scalar_lea.sflag [#allocation6], 1
    %12 = vsyncpa %s11, 0
    %13 = vsyncpa [#allocation4], 0
    %s14 = scalar_lea.sflag [#allocation4], 1
    %15 = vsyncpa %s14, 0
    loop: start=0, step=1, limit=4
    $region2: #{tpu_custom_call.1} parent=1 // loop_pre_header
      _
    $region3: #{tpu_custom_call.1} parent=1 // loop_header
      %s17 = sphi 0, %s21
      %p18 = scmp.ge.s32.totalorder %s17, 4
      %s24 = sphi 0, %s36
      %s25 = sphi 0, %s32
      %s26 = sphi 0, %s24
      %s27 = sphi 0, %s25
      %s28 = sphi 0, %s26
      %s29 = sphi 0, %s27
      %s41 = sphi 0, %s43
      %s44 = sphi 0, %s41
      %s45 = sphi 0, %s44
      %s61 = sphi 0, %s45
      %s69 = sphi 0, %s71
      %s72 = sphi 0, %s69
      %s73 = sphi 0, %s72
      %s89 = sphi 0, %s73
      %s95 = sphi 0, %s97
      %s98 = sphi 0, %s95
      %s99 = sphi 0, %s98
      %s115 = sphi 0, %s99
    $region4: #{tpu_custom_call.1} parent=1 // loop_header_branch
      %20 = sbr.rel (%p18) target = $region8
    $region5: #{tpu_custom_call.1} parent=1 // loop_body
      %s22 = ssub.s32 %s17, 1
      %s23 = ssub.s32 %s17, 2
      %s30 = sadd.s32 1, %s25
      %p31 = scmp.ge.s32.totalorder %s30, 1
      %s32 = scalar_select %p31, 0, %s30
      %s33 = sadd.s32 1, %s24
      %s34 = scalar_select %p31, %s33, %s24
      %p35 = scmp.ge.s32.totalorder %s34, 2
      %s36 = scalar_select %p35, 0, %s34
      %s37 = ssub.s32 %s24, %s36
      %s38 = ssub.s32 %s25, %s32
      %s39 = sor.u32 %s37, %s38
      %p40 = scmp.eq.s32.totalorder %s39, 0
      %s42 = sadd.s32 %s41, 1
      %s43 = scalar_select %p40, %s41, %s42
      %p46 = pneg %p40
      %p47 = scmp.eq.s32.totalorder %s17, 1
      %p48 = por %p46, %p47
      %p49 = scmp.ne.s32.totalorder %s41, %s44
      %p50 = scmp.eq.s32.totalorder %s17, 0
      %p51 = por %p49, %p50
      %p52 = scmp.ne.s32.totalorder %s41, %s44
      %p53 = scmp.eq.s32.totalorder %s22, 1
      %p54 = por %p52, %p53
      %p55 = scmp.ne.s32.totalorder %s44, %s45
      %p56 = scmp.eq.s32.totalorder %s22, 0
      %p57 = por %p55, %p56
      %p58 = scmp.ne.s32.totalorder %s44, %s45
      %p59 = scmp.eq.s32.totalorder %s23, 1
      %p60 = por %p58, %p59
      %p62 = scmp.ne.s32.totalorder %s45, %s61
      %p63 = scmp.eq.s32.totalorder %s23, 0
      %p64 = por %p62, %p63
      %s65 = ssub.s32 %s24, %s36
      %s66 = ssub.s32 %s25, %s32
      %s67 = sor.u32 %s65, %s66
      %p68 = scmp.eq.s32.totalorder %s67, 0
      %s70 = sadd.s32 %s69, 1
      %s71 = scalar_select %p68, %s69, %s70
      %p74 = pneg %p68
      %p75 = scmp.eq.s32.totalorder %s17, 1
      %p76 = por %p74, %p75
      %p77 = scmp.ne.s32.totalorder %s69, %s72
      %p78 = scmp.eq.s32.totalorder %s17, 0
      %p79 = por %p77, %p78
      %p80 = scmp.ne.s32.totalorder %s69, %s72
      %p81 = scmp.eq.s32.totalorder %s22, 1
      %p82 = por %p80, %p81
      %p83 = scmp.ne.s32.totalorder %s72, %s73
      %p84 = scmp.eq.s32.totalorder %s22, 0
      %p85 = por %p83, %p84
      %p86 = scmp.ne.s32.totalorder %s72, %s73
      %p87 = scmp.eq.s32.totalorder %s23, 1
      %p88 = por %p86, %p87
      %p90 = scmp.ne.s32.totalorder %s73, %s89
      %p91 = scmp.eq.s32.totalorder %s23, 0
      %p92 = por %p90, %p91
      %s93 = ssub.s32 %s24, %s36
      %p94 = scmp.eq.s32.totalorder %s93, 0
      %s96 = sadd.s32 %s95, 1
      %s97 = scalar_select %p94, %s95, %s96
      %p100 = pneg %p94
      %p101 = scmp.eq.s32.totalorder %s17, 1
      %p102 = por %p100, %p101
      %p103 = scmp.ne.s32.totalorder %s95, %s98
      %p104 = scmp.eq.s32.totalorder %s17, 0
      %p105 = por %p103, %p104
      %p106 = scmp.ne.s32.totalorder %s95, %s98
      %p107 = scmp.eq.s32.totalorder %s22, 1
      %p108 = por %p106, %p107
      %p109 = scmp.ne.s32.totalorder %s98, %s99
      %p110 = scmp.eq.s32.totalorder %s22, 0
      %p111 = por %p109, %p110
      %p112 = scmp.ne.s32.totalorder %s98, %s99
      %p113 = scmp.eq.s32.totalorder %s23, 1
      %p114 = por %p112, %p113
      %p116 = scmp.ne.s32.totalorder %s99, %s115
      %p117 = scmp.eq.s32.totalorder %s23, 0
      %p118 = por %p116, %p117
      %p119 = scmp.le.s32.totalorder 1, %s17
      %p120 = scmp.lt.s32.totalorder %s17, 3
      %p121 = pnand %p119, %p120
      %p122 = pneg %p121
      // Predicated region
      $region9: #{tpu_custom_call.1} parent=5 // pred_check
        _
      $region10: #{tpu_custom_call.1} parent=5 // pred_check_branch
        %124 = sbr.rel (%p121) target = $region12
      $region11: #{tpu_custom_call.1} parent=5 // pred_region
        %s125 = ssub.s32 %s17, 1
      $region12: #{tpu_custom_call.1} parent=5 // pred_fallthru
        _
      %p126 = scmp.lt.s32.totalorder %s17, 2
      // Predicated region
      $region13: #{tpu_custom_call.1} parent=5 // pred_check
        %p127 = pneg %p126
      $region14: #{tpu_custom_call.1} parent=5 // pred_check_branch
        %129 = sbr.rel (%p127) target = $region16
      $region15: #{tpu_custom_call.1} parent=5 // pred_region
        // Predicated region
        $region17: #{tpu_custom_call.1} parent=15 // pred_check
          %p130 = pneg %p51
        $region18: #{tpu_custom_call.1} parent=15 // pred_check_branch
          %132 = sbr.rel (%p130) target = $region20
        $region19: #{tpu_custom_call.1} parent=15 // pred_region
          %s133 = sand.u32 %s41, 1
          %s134 = scalar_lea.sflag [#allocation3], %s133
          %s135 = sand.u32 %s41, 1
          %s136 = smul.addr %s135, 16
          %s137 = scalar_lea.vmem [#allocation2], %s136
          %s138 = smul.u32 4, %s25
          %140 = vsyncadd %s134, 0
          %s141 = smul.addr %s24, 4
          %s142 = sadd.s32 %s138, %s141
          %s143 = smul.addr %s142, 4
          %s144 = scalar_lea.hbm %s0, %s143
          %s146 = sshll.u32 %s144, 4
          %s147 = int_to_ptr.hbm [resolvable:$true] %s146
          %s148 = sshll.u32 %s137, 4
          %s149 = int_to_ptr.vmem [resolvable:$true] %s148
          %151 = dma.hbm_to_vmem [thread:$0]  %s147, 256, %s149, %s134
        $region20: #{tpu_custom_call.1} parent=15 // pred_fallthru
          _
        // Predicated region
        $region21: #{tpu_custom_call.1} parent=15 // pred_check
          %p152 = pneg %p79
        $region22: #{tpu_custom_call.1} parent=15 // pred_check_branch
          %154 = sbr.rel (%p152) target = $region24
        $region23: #{tpu_custom_call.1} parent=15 // pred_region
          %s155 = sand.u32 %s69, 1
          %s156 = scalar_lea.sflag [#allocation6], %s155
          %s157 = sand.u32 %s69, 1
          %s158 = smul.addr %s157, 4
          %s159 = scalar_lea.vmem [#allocation5], %s158
          %s160 = smul.u32 4, %s25
          %162 = vsyncadd %s156, 0
          %s163 = smul.addr %s24, 4
          %s164 = sadd.s32 %s160, %s163
          %s165 = scalar_lea.hbm %s1, %s164
          %s167 = sshll.u32 %s165, 4
          %s168 = int_to_ptr.hbm [resolvable:$true] %s167
          %s169 = sshll.u32 %s159, 4
          %s170 = int_to_ptr.vmem [resolvable:$true] %s169
          %172 = dma.hbm_to_vmem [thread:$0]  %s168, 64, %s170, %s156
        $region24: #{tpu_custom_call.1} parent=15 // pred_fallthru
          _
      $region16: #{tpu_custom_call.1} parent=5 // pred_fallthru
        _
      %p173 = scmp.le.s32.totalorder 1, %s17
      %p174 = scmp.lt.s32.totalorder %s17, 3
      %p175 = pnand %p173, %p174
      %p176 = pneg %p175
      // Predicated region
      $region25: #{tpu_custom_call.1} parent=5 // pred_check
        _
      $region26: #{tpu_custom_call.1} parent=5 // pred_check_branch
        %178 = sbr.rel (%p175) target = $region28
      $region27: #{tpu_custom_call.1} parent=5 // pred_region
        %s179 = ssub.s32 %s17, 1
        %s180 = sand.u32 %s44, 1
        %s181 = scalar_lea.sflag [#allocation3], %s180
        %s182 = sand.u32 %s44, 1
        %s183 = smul.addr %s182, 16
        %s184 = scalar_lea.vmem [#allocation2], %s183
        // Predicated region
        $region29: #{tpu_custom_call.1} parent=27 // pred_check
          %p185 = pneg %p57
        $region30: #{tpu_custom_call.1} parent=27 // pred_check_branch
          %187 = sbr.rel (%p185) target = $region32
        $region31: #{tpu_custom_call.1} parent=27 // pred_region
          %189 = dma.done %s181, 256
        $region32: #{tpu_custom_call.1} parent=27 // pred_fallthru
          _
        %s190 = sand.u32 %s72, 1
        %s191 = scalar_lea.sflag [#allocation6], %s190
        %s192 = sand.u32 %s72, 1
        %s193 = smul.addr %s192, 4
        %s194 = scalar_lea.vmem [#allocation5], %s193
        // Predicated region
        $region33: #{tpu_custom_call.1} parent=27 // pred_check
          %p195 = pneg %p85
        $region34: #{tpu_custom_call.1} parent=27 // pred_check_branch
          %197 = sbr.rel (%p195) target = $region36
        $region35: #{tpu_custom_call.1} parent=27 // pred_region
          %199 = dma.done %s191, 64
        $region36: #{tpu_custom_call.1} parent=27 // pred_fallthru
          _
        %s200 = sand.u32 %s44, 1
        %s201 = scalar_lea.sflag [#allocation3], %s200
        %s202 = sand.u32 %s44, 1
        %s203 = smul.addr %s202, 16
        %s204 = scalar_lea.vmem [#allocation2], %s203
        %p205 = pneg %p57
        %p206 = pneg %p54
        %s207 = sand.u32 %s72, 1
        %s208 = scalar_lea.sflag [#allocation6], %s207
        %s209 = sand.u32 %s72, 1
        %s210 = smul.addr %s209, 4
        %s211 = scalar_lea.vmem [#allocation5], %s210
        %p212 = pneg %p85
        %p213 = pneg %p82
        %p214 = pneg %p111
        %p215 = pneg %p108
        %s216 = sand.u32 %s98, 1
        %s217 = scalar_lea.sflag [#allocation4], %s216
        %s218 = sand.u32 %s98, 1
        %s219 = smul.addr %s218, 8
        %s220 = scalar_lea.vmem [#allocation7], %s219
        %s221 = smul.u32 4, %s27
        %s222 = smul.u32 4, %s27
        %p223 = scmp.eq.s32.totalorder %s27, 0
        // Predicated region
        $region37: #{tpu_custom_call.1} parent=27 // pred_check
          %p224 = pneg %p223
        $region38: #{tpu_custom_call.1} parent=27 // pred_check_branch
          %226 = sbr.rel (%p224) target = $region40
        $region39: #{tpu_custom_call.1} parent=27 // pred_region
          %227 = vst [vmem:[%s220] sm:$0xff] 0.0
        $region40: #{tpu_custom_call.1} parent=27 // pred_fallthru
          _
        %v228 = vld [vmem:[%s184] sm:$0xff]
        %v229 = vld [vmem:[%s184 + $0x8] sm:$0xff]
        %232 = vst [vmem:[#allocation1] ss:$2 sm:$0xff] %v228
        %s233 = scalar_lea.vmem [#allocation1], 16
        %234 = vst [vmem:[%s233] ss:$2 sm:$0xff] %v229
        %v235 = vld.sshfl [vmem:[#allocation1] sm:$0xff pattern:$0x75316420]
        %v236 = vld.sshfl [vmem:[#allocation1 + $0x8] sm:$0xff pattern:$0x75316420]
        %v237 = vld.sshfl [vmem:[#allocation1 + $0x10] sm:$0xff pattern:$0x75316420]
        %v238 = vld.sshfl [vmem:[#allocation1 + $0x18] sm:$0xff pattern:$0x75316420]
        %vm243 = vcmask 1043456
        %v244 = vsel %vm243, %v235, -inf
        %v245 = vrot.slane %v244, 4
        %v246 = vmax.f32 %v244, %v245
        %v247 = vrot.slane %v246, 2
        %v248 = vmax.f32 %v246, %v247
        %v249 = vrot.slane %v248, 1
        %v250 = vmax.f32 %v248, %v249
        %v251 = vsel %vm243, %v236, -inf
        %v252 = vrot.slane %v251, 4
        %v253 = vmax.f32 %v251, %v252
        %v254 = vrot.slane %v253, 2
        %v255 = vmax.f32 %v253, %v254
        %v256 = vrot.slane %v255, 1
        %v257 = vmax.f32 %v255, %v256
        %v258 = vsel %vm243, %v237, -inf
        %v259 = vrot.slane %v258, 4
        %v260 = vmax.f32 %v258, %v259
        %v261 = vrot.slane %v260, 2
        %v262 = vmax.f32 %v260, %v261
        %v263 = vrot.slane %v262, 1
        %v264 = vmax.f32 %v262, %v263
        %v265 = vsel %vm243, %v238, -inf
        %v266 = vrot.slane %v265, 4
        %v267 = vmax.f32 %v265, %v266
        %v268 = vrot.slane %v267, 2
        %v269 = vmax.f32 %v267, %v268
        %v270 = vrot.slane %v269, 1
        %v271 = vmax.f32 %v269, %v270
        %v276 = vrot.slane %v257, 4
        %v277 = vrot.slane %v271, 4
        %v278 = vsel %vm243, %v250, %v276
        %v279 = vsel %vm243, %v264, %v277
        %v282 = vsub.f32 %v228, %v278
        %v283 = vsub.f32 %v229, %v279
        %v284 = vmul.f32 %v282, 1.442695
        %v285 = vpow.pop %v284
        %v286 = vmul.f32 %v283, 1.442695
        %v287 = vpow.pop %v286
        %290 = vst [vmem:[#allocation1] ss:$2 sm:$0xff] %v285
        %s291 = scalar_lea.vmem [#allocation1], 16
        %292 = vst [vmem:[%s291] ss:$2 sm:$0xff] %v287
        %v293 = vld.sshfl [vmem:[#allocation1] sm:$0xff pattern:$0x75316420]
        %v294 = vld.sshfl [vmem:[#allocation1 + $0x8] sm:$0xff pattern:$0x75316420]
        %v295 = vld.sshfl [vmem:[#allocation1 + $0x10] sm:$0xff pattern:$0x75316420]
        %v296 = vld.sshfl [vmem:[#allocation1 + $0x18] sm:$0xff pattern:$0x75316420]
        %v301 = vsel %vm243, %v293, 0.0
        %v302 = vrot.slane %v301, 4
        %v303 = vadd.f32 %v301, %v302
        %v304 = vrot.slane %v303, 2
        %v305 = vadd.f32 %v303, %v304
        %v306 = vrot.slane %v305, 1
        %v307 = vadd.f32 %v305, %v306
        %v308 = vsel %vm243, %v294, 0.0
        %v309 = vrot.slane %v308, 4
        %v310 = vadd.f32 %v308, %v309
        %v311 = vrot.slane %v310, 2
        %v312 = vadd.f32 %v310, %v311
        %v313 = vrot.slane %v312, 1
        %v314 = vadd.f32 %v312, %v313
        %v315 = vsel %vm243, %v295, 0.0
        %v316 = vrot.slane %v315, 4
        %v317 = vadd.f32 %v315, %v316
        %v318 = vrot.slane %v317, 2
        %v319 = vadd.f32 %v317, %v318
        %v320 = vrot.slane %v319, 1
        %v321 = vadd.f32 %v319, %v320
        %v322 = vsel %vm243, %v296, 0.0
        %v323 = vrot.slane %v322, 4
        %v324 = vadd.f32 %v322, %v323
        %v325 = vrot.slane %v324, 2
        %v326 = vadd.f32 %v324, %v325
        %v327 = vrot.slane %v326, 1
        %v328 = vadd.f32 %v326, %v327
        %v329 = vrcp.pop %v307
        %v330 = vrcp.pop %v314
        %v331 = vrcp.pop %v321
        %v332 = vrcp.pop %v328
        %v333 = vld [vmem:[%s194] sm:$0xf]
        %v334 = vlaneseq
        %v335 = vshrl.u32 %v334, 7
        %v336 = vperm.slane %v333, 0
        %v337 = vperm.slane %v333, 1
        %v338 = vperm.slane %v333, 2
        %v339 = vperm.slane %v333, 3
        %vm340 = vcmp.eq.s32.totalorder %v336, %v335
        %vm341 = vcmp.eq.s32.totalorder %v337, %v335
        %vm342 = vcmp.eq.s32.totalorder %v338, %v335
        %vm343 = vcmp.eq.s32.totalorder %v339, %v335
        %344 = vst [vmem:[#allocation1] ss:$2 sm:$0xff] %v285
        %s345 = scalar_lea.vmem [#allocation1], 16
        %346 = vst [vmem:[%s345] ss:$2 sm:$0xff] %v287
        %v347 = vld.sshfl [vmem:[#allocation1] sm:$0xff pattern:$0x75316420]
        %v348 = vld.sshfl [vmem:[#allocation1 + $0x8] sm:$0xff pattern:$0x75316420]
        %v349 = vld.sshfl [vmem:[#allocation1 + $0x10] sm:$0xff pattern:$0x75316420]
        %v350 = vld.sshfl [vmem:[#allocation1 + $0x18] sm:$0xff pattern:$0x75316420]
        %v355 = vsel %vm340, %v347, 0.0
        %v356 = vsel %vm341, %v348, 0.0
        %v357 = vsel %vm342, %v349, 0.0
        %v358 = vsel %vm343, %v350, 0.0
        %v359 = vsel %vm243, %v355, 0.0
        %v360 = vrot.slane %v359, 4
        %v361 = vadd.f32 %v359, %v360
        %v362 = vrot.slane %v361, 2
        %v363 = vadd.f32 %v361, %v362
        %v364 = vrot.slane %v363, 1
        %v365 = vadd.f32 %v363, %v364
        %v366 = vsel %vm243, %v356, 0.0
        %v367 = vrot.slane %v366, 4
        %v368 = vadd.f32 %v366, %v367
        %v369 = vrot.slane %v368, 2
        %v370 = vadd.f32 %v368, %v369
        %v371 = vrot.slane %v370, 1
        %v372 = vadd.f32 %v370, %v371
        %v373 = vsel %vm243, %v357, 0.0
        %v374 = vrot.slane %v373, 4
        %v375 = vadd.f32 %v373, %v374
        %v376 = vrot.slane %v375, 2
        %v377 = vadd.f32 %v375, %v376
        %v378 = vrot.slane %v377, 1
        %v379 = vadd.f32 %v377, %v378
        %v380 = vsel %vm243, %v358, 0.0
        %v381 = vrot.slane %v380, 4
        %v382 = vadd.f32 %v380, %v381
        %v383 = vrot.slane %v382, 2
        %v384 = vadd.f32 %v382, %v383
        %v385 = vrot.slane %v384, 1
        %v386 = vadd.f32 %v384, %v385
        %v387 = vld [vmem:[%s220] sm:$0xff]
        %v388 = vmul.f32 %v365, %v329
        %v389 = vmul.f32 %v372, %v330
        %v390 = vmul.f32 %v379, %v331
        %v391 = vmul.f32 %v386, %v332
        %vm392 = vcmask 1040384
        %v393 = vsel %vm392, %v388, 0.0
        %v394 = vsel %vm392, %v389, 0.0
        %v395 = vadd.f32 %v393, %v394
        %v396 = vsel %vm392, %v390, 0.0
        %v397 = vadd.f32 %v395, %v396
        %v398 = vsel %vm392, %v391, 0.0
        %v399 = vadd.f32 %v397, %v398
        %400 = vadd.xlane.f32.xlu0 %v399
        %v401 = vpop.xlane.xlu0 %400
        %v402 = vrot.slane %v401, 4
        %v403 = vadd.f32 %v401, %v402
        %v404 = vrot.slane %v403, 2
        %v405 = vadd.f32 %v403, %v404
        %v406 = vrot.slane %v405, 1
        %v407 = vadd.f32 %v405, %v406
        %s408 = vtos %v407
        %v409 = vstv %s408
        %v410 = vadd.f32 %v387, %v409
        %411 = vst [vmem:[%s220] sm:$0xff] %v410
        // Predicated region
        $region41: #{tpu_custom_call.1} parent=27 // pred_check
          %p412 = pneg %p223
        $region42: #{tpu_custom_call.1} parent=27 // pred_check_branch
          %414 = sbr.rel (%p412) target = $region44
        $region43: #{tpu_custom_call.1} parent=27 // pred_region
          %v415 = vld [vmem:[%s220] sm:$0xff]
          %v416 = vadd.f32 %v415, 0.01
          %v417 = vrcp.pop 512.01
          %v418 = vmul.f32 512.01, %v417
          %v419 = vsub.f32 1.0, %v418
          %v420 = vmul.f32 %v417, %v419
          %v421 = vadd.f32 %v417, %v420
          %vm422 = vweird.f32 %v417
          %v423 = vsel %vm422, %v417, %v421
          %v424 = vmul.f32 %v416, %v423
          %v425 = vsub.f32 1.0, %v424
          %426 = vst [vmem:[%s220] sm:$0xff] %v425
        $region44: #{tpu_custom_call.1} parent=27 // pred_fallthru
          _
        %s427 = sand.u32 %s98, 1
        %s428 = scalar_lea.sflag [#allocation4], %s427
        %s429 = sand.u32 %s98, 1
        %s430 = smul.addr %s429, 8
        %s431 = scalar_lea.vmem [#allocation7], %s430
        // Predicated region
        $region45: #{tpu_custom_call.1} parent=27 // pred_check
          %p432 = pneg %p108
        $region46: #{tpu_custom_call.1} parent=27 // pred_check_branch
          %434 = sbr.rel (%p432) target = $region48
        $region47: #{tpu_custom_call.1} parent=27 // pred_region
          %436 = vsyncadd %s428, 0
          %s437 = smul.addr %s26, 8
          %s438 = scalar_lea.hbm %s2, %s437
          %s440 = sshll.u32 %s431, 4
          %s441 = int_to_ptr.vmem [resolvable:$true] %s440
          %s442 = sshll.u32 %s438, 4
          %s443 = int_to_ptr.hbm [resolvable:$true] %s442
          %445 = dma.vmem_to_hbm [thread:$0]  %s441, 128, %s443, %s428
        $region48: #{tpu_custom_call.1} parent=27 // pred_fallthru
          _
      $region28: #{tpu_custom_call.1} parent=5 // pred_fallthru
        _
      %p446 = scmp.le.s32.totalorder 2, %s17
      // Predicated region
      $region49: #{tpu_custom_call.1} parent=5 // pred_check
        %p447 = pneg %p446
      $region50: #{tpu_custom_call.1} parent=5 // pred_check_branch
        %449 = sbr.rel (%p447) target = $region52
      $region51: #{tpu_custom_call.1} parent=5 // pred_region
        %s450 = ssub.s32 %s17, 2
        // Predicated region
        $region53: #{tpu_custom_call.1} parent=51 // pred_check
          %p451 = pneg %p114
        $region54: #{tpu_custom_call.1} parent=51 // pred_check_branch
          %453 = sbr.rel (%p451) target = $region56
        $region55: #{tpu_custom_call.1} parent=51 // pred_region
          %s454 = sand.u32 %s99, 1
          %s455 = scalar_lea.sflag [#allocation4], %s454
          %s456 = sand.u32 %s99, 1
          %s457 = smul.addr %s456, 8
          %s458 = scalar_lea.vmem [#allocation7], %s457
          %460 = dma.done %s455, 128
        $region56: #{tpu_custom_call.1} parent=51 // pred_fallthru
          _
      $region52: #{tpu_custom_call.1} parent=5 // pred_fallthru
        _
    $region6: #{tpu_custom_call.1} parent=1 // loop_footer
      %s21 = sadd.s32 1, %s17
    $region7: #{tpu_custom_call.1} parent=1 // loop_footer_branch
      %16 = sbr.rel target = $region3
    $region8: #{tpu_custom_call.1} parent=1 // loop_exit
      _
    %461 = vsyncpa [#allocation3], 1
    %s462 = scalar_lea.sflag [#allocation3], 1
    %463 = vsyncpa %s462, 1
    %464 = vsyncpa [#allocation6], 1
    %s465 = scalar_lea.sflag [#allocation6], 1
    %466 = vsyncpa %s465, 1
    %467 = vsyncpa [#allocation4], 1
    %s468 = scalar_lea.sflag [#allocation4], 1
    %469 = vsyncpa %s468, 1

</llo_original>
